<compile_context>
chip_gen: v7x
topology: tpu7x:2x2x1
jax: 0.10.0
libtpu: 0.0.40
codegen_flags: <defaults>
</compile_context>

<pallas_src>
import functools

import jax
import jax.numpy as jnp
from jax.experimental import pallas as pl
from jax.experimental.pallas import tpu as pltpu


# ---------------------------------------------------------------------------
# Tunables
# ---------------------------------------------------------------------------
_VMEM_LIMIT_BYTES = 32 * 1024 * 1024   # explicit: > v5e 16 MiB scoped default,
                                       # comfortably < v7x 64 MiB physical VMEM
_FUSED_MAX_ELEMS = 512 * 1024          # fused single-block path while x <= 2 MiB f32
_BLOCK_ELEMS = 1 << 19                 # ~2 MiB f32 per operand per block
_MAX_BLOCK_COLS = 16 * 1024            # cap on the lane extent of one block


def _softplus(x):
    # Numerically stable softplus built only from ops that lower cleanly in
    # Mosaic (avoids log1p): softplus(x) = max(x, 0) + log(1 + exp(-|x|)).
    return jnp.maximum(x, 0.0) + jnp.log(1.0 + jnp.exp(-jnp.abs(x)))


# ---------------------------------------------------------------------------
# Kernels
# ---------------------------------------------------------------------------
def _fused_kernel(scal_ref, x_ref, noise_ref, wmu_ref, wsig_ref, out_ref):
    """Single-block fast path: row dots + scalar epilogue + mask/scale apply."""
    b_mu = scal_ref[0]
    b_sig = scal_ref[1]
    inv_c = scal_ref[2]

    x = x_ref[...]                                               # (c, n) f32
    mu_rows = jnp.sum(x * wmu_ref[...], axis=1, keepdims=True)   # (c, 1)
    sig_rows = jnp.sum(x * wsig_ref[...], axis=1, keepdims=True)

    mu = jnp.sum(mu_rows, axis=0, keepdims=True) * inv_c + b_mu            # (1, 1)
    sigma = jnp.sum(_softplus(sig_rows + b_sig), axis=0, keepdims=True) * inv_c

    # 1 / sigmoid(t) == 1 + exp(-t): exact, no divide / approx reciprocal.
    # (3.14/8.0 carried over from the PyTorch source on purpose.)
    t = mu / jnp.sqrt(1.0 + (3.14 / 8.0) * sigma * sigma)
    inv_denom = 1.0 + jnp.exp(-t)

    noise = noise_ref[...].astype(jnp.float32)          # bf16 storage -> f32 math
    mask = jax.nn.sigmoid(mu + sigma * noise)           # EUP transcendental
    out_ref[...] = x * mask * inv_denom


def _rowstats_kernel(bias_ref, x_ref, wmu_ref, wsig_ref, mu_ref, sp_ref,
                     acc_mu, acc_sig):
    """Tiled pass 1: per-row dots with the fused projection rows.

    grid = (row_tiles, col_tiles); the column axis is a per-row-tile reduction
    carried in VMEM scratch, and softplus is applied in-kernel (idle EUP slot)
    so the XLA epilogue is just two tiny means.
    """
    k = pl.program_id(1)

    @pl.when(k == 0)
    def _init():
        acc_mu[...] = jnp.zeros_like(acc_mu)
        acc_sig[...] = jnp.zeros_like(acc_sig)

    x = x_ref[...]                                           # (tile_c, tile_n) f32
    acc_mu[...] += jnp.sum(x * wmu_ref[...], axis=1, keepdims=True)
    acc_sig[...] += jnp.sum(x * wsig_ref[...], axis=1, keepdims=True)

    @pl.when(k == pl.num_programs(1) - 1)
    def _finalize():
        mu_ref[...] = acc_mu[...]
        sp_ref[...] = _softplus(acc_sig[...] + bias_ref[0])


def _apply_kernel(scal_ref, x_ref, noise_ref, out_ref):
    """Tiled pass 2: lane-dense elementwise  out = x * sigmoid(mu+sigma*eps) * inv."""
    mu = scal_ref[0]
    sigma = scal_ref[1]
    inv_denom = scal_ref[2]
    noise = noise_ref[...].astype(jnp.float32)        # bf16 storage -> f32 math
    mask = jax.nn.sigmoid(mu + sigma * noise)
    out_ref[...] = x_ref[...] * mask * inv_denom


# ---------------------------------------------------------------------------
# Tiling helpers
# ---------------------------------------------------------------------------
def _pick_tile_cols(n):
    """Column (lane) extent of a block: full n, or a 128-multiple divisor of n."""
    if n <= _MAX_BLOCK_COLS or n % 128 != 0:
        return n
    for t in range(_MAX_BLOCK_COLS, 127, -128):
        if n % t == 0:
            return t
    return n


def _pick_tile_rows(rows, cols):
    """Row (sublane) extent: near the per-block element budget, multiple of 8."""
    t = max(8, _BLOCK_ELEMS // max(cols, 1))
    if t >= rows:
        return rows
    return max(8, (t // 8) * 8)


def _lane_dense_view(c, n):
    """(rows, lanes) with lanes a multiple of 128, or None if impossible."""
    total = c * n
    for lanes in (4096, 2048, 1024, 512, 256, 128):
        if total % lanes == 0:
            return total // lanes, lanes
    return None


# ---------------------------------------------------------------------------
# One-time parameter fusion (call at module init, not per forward)
# ---------------------------------------------------------------------------
def fuse_dropout_params(weight_h, bias_h, weight_mu, bias_mu,
                        weight_sigma, bias_sigma):
    """Analytic fusion of the two tiny projections:
         w_mu_eff  = W_mu    @ W_h     (1, n)   b_mu_eff  = b_h*sum(W_mu) + b_mu
         w_sig_eff = W_sigma @ W_h     (1, n)   b_sig_eff = b_h*sum(W_s)  + b_sigma
    so h is never materialised and no under-shaped MXU matmuls remain."""
    wh = weight_h.astype(jnp.float32)                         # (hid, n)
    wmu = weight_mu.astype(jnp.float32)                       # (1, hid)
    wsig = weight_sigma.astype(jnp.float32)                   # (1, hid)
    w_mu_row = wmu @ wh                                       # (1, n)
    w_sig_row = wsig @ wh                                     # (1, n)
    bh = bias_h.astype(jnp.float32)[0]
    b_mu_eff = bh * jnp.sum(wmu) + bias_mu.astype(jnp.float32)[0]
    b_sig_eff = bh * jnp.sum(wsig) + bias_sigma.astype(jnp.float32)[0]
    return w_mu_row, w_sig_row, b_mu_eff, b_sig_eff


# ---------------------------------------------------------------------------
# Forward paths
# ---------------------------------------------------------------------------
def _forward_fused(x, noise, w_mu_row, w_sig_row, b_mu_eff, b_sig_eff):
    c, n = x.shape
    scal = jnp.stack([b_mu_eff, b_sig_eff,
                      jnp.asarray(1.0 / c, jnp.float32)]).astype(jnp.float32)
    return pl.pallas_call(
        _fused_kernel,
        out_shape=jax.ShapeDtypeStruct((c, n), jnp.float32),
        grid=(1,),
        in_specs=[
            pl.BlockSpec(memory_space=pltpu.MemorySpace.SMEM),   # [b_mu, b_sig, 1/c]
            pl.BlockSpec((c, n), lambda i: (0, 0)),              # x (f32)
            pl.BlockSpec((c, n), lambda i: (0, 0)),              # noise (bf16)
            pl.BlockSpec((1, n), lambda i: (0, 0)),              # w_mu_eff row
            pl.BlockSpec((1, n), lambda i: (0, 0)),              # w_sig_eff row
        ],
        out_specs=pl.BlockSpec((c, n), lambda i: (0, 0)),
        compiler_params=pltpu.CompilerParams(
            dimension_semantics=("arbitrary",),
            vmem_limit_bytes=_VMEM_LIMIT_BYTES),
    )(scal, x, noise, w_mu_row, w_sig_row)


def _forward_tiled(x, noise, w_mu_row, w_sig_row, b_mu_eff, b_sig_eff):
    c, n = x.shape

    # ---- pass 1: per-row reductions + in-kernel softplus -------------------
    tile_n = _pick_tile_cols(n)
    tile_c = _pick_tile_rows(c, tile_n)
    grid1 = (pl.cdiv(c, tile_c), n // tile_n)
    b_sig = jnp.reshape(b_sig_eff, (1,)).astype(jnp.float32)

    mu_rows, sp_rows = pl.pallas_call(
        _rowstats_kernel,
        out_shape=(jax.ShapeDtypeStruct((c, 1), jnp.float32),
                   jax.ShapeDtypeStruct((c, 1), jnp.float32)),
        grid=grid1,
        in_specs=[
            pl.BlockSpec(memory_space=pltpu.MemorySpace.SMEM),        # b_sig_eff
            pl.BlockSpec((tile_c, tile_n), lambda i, k: (i, k)),      # x
            pl.BlockSpec((1, tile_n), lambda i, k: (0, k)),           # w_mu_eff
            pl.BlockSpec((1, tile_n), lambda i, k: (0, k)),           # w_sig_eff
        ],
        out_specs=(pl.BlockSpec((tile_c, 1), lambda i, k: (i, 0)),
                   pl.BlockSpec((tile_c, 1), lambda i, k: (i, 0))),
        scratch_shapes=[pltpu.VMEM((tile_c, 1), jnp.float32),
                        pltpu.VMEM((tile_c, 1), jnp.float32)],
        compiler_params=pltpu.CompilerParams(
            dimension_semantics=("parallel", "arbitrary"),
            vmem_limit_bytes=_VMEM_LIMIT_BYTES),
    )(b_sig, x, w_mu_row, w_sig_row)

    # Tiny scalar epilogue: two means + a handful of scalar transcendentals.
    inv_c = jnp.asarray(1.0 / c, jnp.float32)
    mu = jnp.sum(mu_rows) * inv_c + b_mu_eff
    sigma = jnp.sum(sp_rows) * inv_c
    t = mu / jnp.sqrt(1.0 + (3.14 / 8.0) * sigma * sigma)
    inv_denom = 1.0 + jnp.exp(-t)                       # == 1 / sigmoid(t), exact
    scal = jnp.stack([mu, sigma, inv_denom]).astype(jnp.float32)

    # ---- pass 2: lane-dense elementwise apply -------------------------------
    if n % 128 == 0:
        rows, width = c, n            # already lane-dense: no reshape at all
        x2, nz2 = x, noise
    else:
        dense = _lane_dense_view(c, n)
        if dense is None:
            rows, width = c, n
            x2, nz2 = x, noise
        else:
            # Row-major element order is preserved, so this reshape does not
            # force a physical relayout of the logical data.
            rows, width = dense
            x2 = x.reshape(rows, width)
            nz2 = noise.reshape(rows, width)

    tile_w = _pick_tile_cols(width)
    tile_r = _pick_tile_rows(rows, tile_w)
    grid2 = (pl.cdiv(rows, tile_r), width // tile_w)

    out2 = pl.pallas_call(
        _apply_kernel,
        out_shape=jax.ShapeDtypeStruct((rows, width), jnp.float32),
        grid=grid2,
        in_specs=[
            pl.BlockSpec(memory_space=pltpu.MemorySpace.SMEM),      # [mu,sigma,inv]
            pl.BlockSpec((tile_r, tile_w), lambda i, j: (i, j)),    # x (f32)
            pl.BlockSpec((tile_r, tile_w), lambda i, j: (i, j)),    # noise (bf16)
        ],
        out_specs=pl.BlockSpec((tile_r, tile_w), lambda i, j: (i, j)),
        compiler_params=pltpu.CompilerParams(
            dimension_semantics=("parallel", "parallel"),
            vmem_limit_bytes=_VMEM_LIMIT_BYTES),
    )(scal, x2, nz2)

    return out2.reshape(c, n)


@functools.partial(jax.jit, static_argnames=("force_tiled",))
def advanced_dropout_forward(x, noise, w_mu_row, w_sig_row,
                             b_mu_eff, b_sig_eff, force_tiled=False):
    """Training-mode AdvancedDropout forward.

    x: (c, n) or (1, c, n); noise: matching N(0,1) samples (bf16 storage OK).
    Returns the same shape as x, float32.  Eval mode is the identity (no kernel).
    """
    orig_shape = x.shape
    if x.ndim == 3:                      # PyTorch path: leading dim of 1 squeezed
        x = x.reshape(x.shape[-2], x.shape[-1])
        noise = noise.reshape(noise.shape[-2], noise.shape[-1])
    c, n = x.shape
    x = x.astype(jnp.float32)

    if (not force_tiled) and c * n <= _FUSED_MAX_ELEMS:
        out = _forward_fused(x, noise, w_mu_row, w_sig_row, b_mu_eff, b_sig_eff)
    else:
        out = _forward_tiled(x, noise, w_mu_row, w_sig_row, b_mu_eff, b_sig_eff)
    return out.reshape(orig_shape)


# ---------------------------------------------------------------------------
# Pure-JAX reference (unfused, mirrors the PyTorch forward exactly)
# ---------------------------------------------------------------------------
def _reference(x, noise, wh, bh, wmu, bmu, wsig, bsig):
    h = x @ wh.T + bh[0]
    mu = jnp.mean(h @ wmu.T + bmu[0])
    sigma = jnp.mean(jax.nn.softplus(h @ wsig.T + bsig[0]))
    mask = jax.nn.sigmoid(mu + sigma * noise)
    denom = jax.nn.sigmoid(mu / jnp.sqrt(1.0 + 3.14 / 8.0 * sigma ** 2))
    return x * mask / denom


if __name__ == "__main__":
    # Module config consistent with __init__: num=64, reduction=16 -> hid=4.
    num = 64
    reduction = 16
    hid = num // reduction          # 4
    c = 8                           # node/batch rows
    init_mu = 0.0
    init_sigma = 1.2

    key = jax.random.PRNGKey(0)
    k_x, k_noise, k_wh, k_bh, k_wmu, k_wsig = jax.random.split(key, 6)

    # Deterministic parameter init mirroring torch.rand(...) * 0.01 etc.
    weight_h = jax.random.uniform(k_wh, (hid, num), jnp.float32) * 0.01
    bias_h = jax.random.uniform(k_bh, (1,), jnp.float32) * 0.01
    weight_mu = jax.random.uniform(k_wmu, (1, hid), jnp.float32) * 0.01
    bias_mu = jnp.array([init_mu], jnp.float32)
    weight_sigma = jax.random.uniform(k_wsig, (1, hid), jnp.float32) * 0.01
    bias_sigma = jnp.array([init_sigma], jnp.float32)

    # Inputs. Noise replaces torch.randn([c, n]); stored bf16 to halve its
    # HBM read (the reference below uses the same bf16-rounded noise values).
    x = jax.random.normal(k_x, (c, num), jnp.float32)
    noise_bf16 = jax.random.normal(k_noise, (c, num), jnp.float32).astype(jnp.bfloat16)

    # One-time fused-parameter precompute (would live at module init).
    fused = fuse_dropout_params(weight_h, bias_h, weight_mu, bias_mu,
                                weight_sigma, bias_sigma)

    ref = _reference(x, noise_bf16.astype(jnp.float32), weight_h, bias_h,
                     weight_mu, bias_mu, weight_sigma, bias_sigma)

    # Fused single-block fast path (what this small shape actually takes).
    out_fused = jax.block_until_ready(
        advanced_dropout_forward(x, noise_bf16, *fused))
    assert out_fused.shape == (c, num) and out_fused.dtype == jnp.float32
    assert jnp.allclose(out_fused, ref, atol=1e-5, rtol=1e-5)

    # Tiled two-pass streaming path (forced, so both paths are exercised).
    out_tiled = jax.block_until_ready(
        advanced_dropout_forward(x, noise_bf16, *fused, force_tiled=True))
    assert out_tiled.shape == (c, num) and out_tiled.dtype == jnp.float32
    assert jnp.allclose(out_tiled, ref, atol=1e-5, rtol=1e-5)

    print("KERNEL_OK")
</pallas_src>

<mosaic_0001>
module attributes {stable_mosaic.version = 11 : i64} {
  func.func @_fused_kernel(%arg0: i32, %arg1: memref<3xf32, #tpu.memory_space<smem>>, %arg2: memref<8x64xf32, #tpu.memory_space<vmem>>, %arg3: memref<8x64xbf16, #tpu.memory_space<vmem>>, %arg4: memref<1x64xf32, #tpu.memory_space<vmem>>, %arg5: memref<1x64xf32, #tpu.memory_space<vmem>>, %arg6: memref<8x64xf32, #tpu.memory_space<vmem>>) attributes {dimension_semantics = [#tpu.dimension_semantics<arbitrary>], iteration_bounds = array<i64: 1>, scalar_prefetch = 0 : i64, scratch_operands = 0 : i64, tpu.core_type = #tpu.core_type<tc>, window_params = [{transform_indices = @transform_0, window_bounds = array<i64: 3>}, {pipeline_mode = #tpu.pipeline_mode<synchronous>, transform_indices = @transform_1, window_bounds = array<i64: 8, 64>}, {pipeline_mode = #tpu.pipeline_mode<synchronous>, transform_indices = @transform_2, window_bounds = array<i64: 8, 64>}, {pipeline_mode = #tpu.pipeline_mode<synchronous>, transform_indices = @transform_3, window_bounds = array<i64: 1, 64>}, {pipeline_mode = #tpu.pipeline_mode<synchronous>, transform_indices = @transform_4, window_bounds = array<i64: 1, 64>}, {pipeline_mode = #tpu.pipeline_mode<synchronous>, transform_indices = @transform_5, window_bounds = array<i64: 8, 64>}]} {
    %c0 = arith.constant 0 : index
    %0 = memref.load %arg1[%c0] : memref<3xf32, #tpu.memory_space<smem>>
    %c1 = arith.constant 1 : index
    %1 = memref.load %arg1[%c1] : memref<3xf32, #tpu.memory_space<smem>>
    %c2 = arith.constant 2 : index
    %2 = memref.load %arg1[%c2] : memref<3xf32, #tpu.memory_space<smem>>
    %c0_0 = arith.constant 0 : index
    %c0_1 = arith.constant 0 : index
    %3 = vector.load %arg2[%c0_0, %c0_1] : memref<8x64xf32, #tpu.memory_space<vmem>>, vector<8x64xf32>
    %c0_2 = arith.constant 0 : index
    %c0_3 = arith.constant 0 : index
    %4 = vector.load %arg4[%c0_2, %c0_3] : memref<1x64xf32, #tpu.memory_space<vmem>>, vector<1x64xf32>
    %5 = vector.broadcast %4 : vector<1x64xf32> to vector<8x64xf32>
    %6 = arith.mulf %3, %5 : vector<8x64xf32>
    %cst = arith.constant dense<0.000000e+00> : vector<8xf32>
    %7 = vector.multi_reduction <add>, %6, %cst [1] : vector<8x64xf32> to vector<8xf32>
    %8 = vector.shape_cast %7 : vector<8xf32> to vector<8x1xf32>
    %c0_4 = arith.constant 0 : index
    %c0_5 = arith.constant 0 : index
    %9 = vector.load %arg5[%c0_4, %c0_5] : memref<1x64xf32, #tpu.memory_space<vmem>>, vector<1x64xf32>
    %10 = vector.broadcast %9 : vector<1x64xf32> to vector<8x64xf32>
    %11 = arith.mulf %3, %10 : vector<8x64xf32>
    %cst_6 = arith.constant dense<0.000000e+00> : vector<8xf32>
    %12 = vector.multi_reduction <add>, %11, %cst_6 [1] : vector<8x64xf32> to vector<8xf32>
    %13 = vector.shape_cast %12 : vector<8xf32> to vector<8x1xf32>
    %cst_7 = arith.constant dense<0.000000e+00> : vector<1xf32>
    %14 = vector.multi_reduction <add>, %8, %cst_7 [0] : vector<8x1xf32> to vector<1xf32>
    %15 = vector.shape_cast %14 : vector<1xf32> to vector<1x1xf32>
    %16 = vector.broadcast %2 : f32 to vector<1x1xf32>
    %17 = arith.mulf %15, %16 : vector<1x1xf32>
    %18 = vector.broadcast %0 : f32 to vector<1x1xf32>
    %19 = arith.addf %17, %18 : vector<1x1xf32>
    %20 = vector.broadcast %1 : f32 to vector<8x1xf32>
    %21 = arith.addf %13, %20 : vector<8x1xf32>
    %cst_8 = arith.constant 0.000000e+00 : f32
    %22 = vector.broadcast %cst_8 : f32 to vector<8x1xf32>
    %23 = arith.maximumf %21, %22 : vector<8x1xf32>
    %24 = math.absf %21 : vector<8x1xf32>
    %cst_9 = arith.constant 0.000000e+00 : f32
    %25 = vector.broadcast %cst_9 : f32 to vector<8x1xf32>
    %26 = arith.subf %25, %24 : vector<8x1xf32>
    %27 = math.exp %26 : vector<8x1xf32>
    %cst_10 = arith.constant 1.000000e+00 : f32
    %28 = vector.broadcast %cst_10 : f32 to vector<8x1xf32>
    %29 = arith.addf %28, %27 : vector<8x1xf32>
    %30 = math.log %29 : vector<8x1xf32>
    %31 = arith.addf %23, %30 : vector<8x1xf32>
    %cst_11 = arith.constant dense<0.000000e+00> : vector<1xf32>
    %32 = vector.multi_reduction <add>, %31, %cst_11 [0] : vector<8x1xf32> to vector<1xf32>
    %33 = vector.shape_cast %32 : vector<1xf32> to vector<1x1xf32>
    %34 = vector.broadcast %2 : f32 to vector<1x1xf32>
    %35 = arith.mulf %33, %34 : vector<1x1xf32>
    %cst_12 = arith.constant 3.925000e-01 : f32
    %36 = vector.broadcast %cst_12 : f32 to vector<1x1xf32>
    %37 = arith.mulf %36, %35 : vector<1x1xf32>
    %38 = arith.mulf %37, %35 : vector<1x1xf32>
    %cst_13 = arith.constant 1.000000e+00 : f32
    %39 = vector.broadcast %cst_13 : f32 to vector<1x1xf32>
    %40 = arith.addf %39, %38 : vector<1x1xf32>
    %41 = math.sqrt %40 : vector<1x1xf32>
    %42 = arith.divf %19, %41 : vector<1x1xf32>
    %cst_14 = arith.constant 0.000000e+00 : f32
    %43 = vector.broadcast %cst_14 : f32 to vector<1x1xf32>
    %44 = arith.subf %43, %42 : vector<1x1xf32>
    %45 = math.exp %44 : vector<1x1xf32>
    %cst_15 = arith.constant 1.000000e+00 : f32
    %46 = vector.broadcast %cst_15 : f32 to vector<1x1xf32>
    %47 = arith.addf %46, %45 : vector<1x1xf32>
    %c0_16 = arith.constant 0 : index
    %c0_17 = arith.constant 0 : index
    %48 = vector.load %arg3[%c0_16, %c0_17] : memref<8x64xbf16, #tpu.memory_space<vmem>>, vector<8x64xbf16>
    %49 = arith.extf %48 : vector<8x64xbf16> to vector<8x64xf32>
    %50 = vector.broadcast %35 : vector<1x1xf32> to vector<8x64xf32>
    %51 = arith.mulf %50, %49 : vector<8x64xf32>
    %52 = vector.broadcast %19 : vector<1x1xf32> to vector<8x64xf32>
    %53 = arith.addf %52, %51 : vector<8x64xf32>
    %54 = arith.negf %53 : vector<8x64xf32>
    %55 = math.exp %54 : vector<8x64xf32>
    %cst_18 = arith.constant 1.000000e+00 : f32
    %56 = vector.broadcast %cst_18 : f32 to vector<8x64xf32>
    %57 = arith.addf %56, %55 : vector<8x64xf32>
    %58 = arith.divf %56, %57 : vector<8x64xf32>
    %59 = arith.mulf %3, %58 : vector<8x64xf32>
    %60 = vector.broadcast %47 : vector<1x1xf32> to vector<8x64xf32>
    %61 = arith.mulf %59, %60 : vector<8x64xf32>
    %c0_19 = arith.constant 0 : index
    %c0_20 = arith.constant 0 : index
    %62 = vector.load %arg6[%c0_19, %c0_20] : memref<8x64xf32, #tpu.memory_space<vmem>>, vector<8x64xf32>
    tpu.vector_store %arg6[%c0_19, %c0_20], %61 {strides = array<i32>} : memref<8x64xf32, #tpu.memory_space<vmem>>, vector<8x64xf32>,
    return
  }
  func.func @transform_0(%arg0: i32) -> i32 {
    %c0_i32 = arith.constant 0 : i32
    %c0_i32_0 = arith.constant 0 : i32
    return %c0_i32 : i32
  }
  func.func @transform_1(%arg0: i32) -> (i32, i32) {
    %c0_i32 = arith.constant 0 : i32
    %c0_i32_0 = arith.constant 0 : i32
    %c0_i32_1 = arith.constant 0 : i32
    return %c0_i32, %c0_i32_0 : i32, i32
  }
  func.func @transform_2(%arg0: i32) -> (i32, i32) {
    %c0_i32 = arith.constant 0 : i32
    %c0_i32_0 = arith.constant 0 : i32
    %c0_i32_1 = arith.constant 0 : i32
    return %c0_i32, %c0_i32_0 : i32, i32
  }
  func.func @transform_3(%arg0: i32) -> (i32, i32) {
    %c0_i32 = arith.constant 0 : i32
    %c0_i32_0 = arith.constant 0 : i32
    %c0_i32_1 = arith.constant 0 : i32
    return %c0_i32, %c0_i32_0 : i32, i32
  }
  func.func @transform_4(%arg0: i32) -> (i32, i32) {
    %c0_i32 = arith.constant 0 : i32
    %c0_i32_0 = arith.constant 0 : i32
    %c0_i32_1 = arith.constant 0 : i32
    return %c0_i32, %c0_i32_0 : i32, i32
  }
  func.func @transform_5(%arg0: i32) -> (i32, i32) {
    %c0_i32 = arith.constant 0 : i32
    %c0_i32_0 = arith.constant 0 : i32
    %c0_i32_1 = arith.constant 0 : i32
    return %c0_i32, %c0_i32_0 : i32, i32
  }
}

</mosaic_0001>

<llo_original>
// kernel: advanced_dropout_forward.1
$region0: #{advanced_dropout_forward.1}
  #allocation0 [shape = 'u32[]', space=smem, size = 0x4, offset = 0x4, fixed_abs, tag = 'smem constant byte address 0x4 - core index']
  #allocation1 [shape = 'u32[144,128]{1,0:T(1,128)}', space=vmem, size = 0x12000, scoped, tag = 'internal scratch']
  %s0 = inlined_call_operand.vmem [shape: f32[3], index: 0, kind: input, shape index: {}]
  %s1 = inlined_call_operand.vmem [shape: f32[8,64], index: 1, kind: input, shape index: {}]
  %s2 = inlined_call_operand.vmem [shape: bf16[8,64], index: 2, kind: input, shape index: {}]
  %s3 = inlined_call_operand.vmem [shape: f32[1,64], index: 3, kind: input, shape index: {}]
  %s4 = inlined_call_operand.vmem [shape: f32[1,64], index: 4, kind: input, shape index: {}]
  %s5 = inlined_call_operand.hbm [shape: f32[8,64], index: 5, kind: output, shape index: {}]
  %s6 = sld [smem:[#allocation0]]
  $region34: #{advanced_dropout_forward.1} parent=0
    _
  %s8 = ssub.s32 1, %s6
  %s9 = scalar_select 0, %s8, %s6
  $region1: #{advanced_dropout_forward.1} parent=0
    #allocation2 [shape = 'u8[512]{0}', space=smem, size = 0x200, scoped, tag = 'input window, operand 0, single buffered']
    #allocation3 [shape = 's32[1]{0}', space=sflag, size = 0x4, scoped, tag = 'scoped memory for advanced_dropout_forward.1']
    #allocation4 [shape = 's32[1]{0}', space=sflag, size = 0x4, scoped, tag = 'scoped memory for advanced_dropout_forward.1']
    #allocation5 [shape = 'u8[4096]{0}', space=vmem, size = 0x1000, scoped, tag = 'output window, operand 0, single buffered']
    %10 = vsyncpa [#allocation4], 0
    %11 = vsyncpa [#allocation3], 0
    // Predicated region
    $region2: #{advanced_dropout_forward.1} parent=1 // pred_check
      _
    $region3: #{advanced_dropout_forward.1} parent=1 // pred_check_branch
      %13 = sbr.rel (0) target = $region5
    $region4: #{advanced_dropout_forward.1} parent=1 // pred_region
      %s15 = ssub.s32 16, 16
      %16 = vsyncadd [#allocation4], %s15
      %s18 = sshll.u32 %s0, 4
      %s19 = int_to_ptr.vmem [resolvable:$true] %s18
      %21 = dma.vmem_to_smem %s19, 16, [#allocation2], [#allocation4]
    $region5: #{advanced_dropout_forward.1} parent=1 // pred_fallthru
      _
    // Predicated region
    $region6: #{advanced_dropout_forward.1} parent=1 // pred_check
      _
    $region7: #{advanced_dropout_forward.1} parent=1 // pred_check_branch
      %23 = sbr.rel (0) target = $region9
    $region8: #{advanced_dropout_forward.1} parent=1 // pred_region
      _
    $region9: #{advanced_dropout_forward.1} parent=1 // pred_fallthru
      _
    // Predicated region
    $region10: #{advanced_dropout_forward.1} parent=1 // pred_check
      _
    $region11: #{advanced_dropout_forward.1} parent=1 // pred_check_branch
      %25 = sbr.rel (0) target = $region13
    $region12: #{advanced_dropout_forward.1} parent=1 // pred_region
      _
    $region13: #{advanced_dropout_forward.1} parent=1 // pred_fallthru
      _
    // Predicated region
    $region14: #{advanced_dropout_forward.1} parent=1 // pred_check
      _
    $region15: #{advanced_dropout_forward.1} parent=1 // pred_check_branch
      %27 = sbr.rel (0) target = $region17
    $region16: #{advanced_dropout_forward.1} parent=1 // pred_region
      _
    $region17: #{advanced_dropout_forward.1} parent=1 // pred_fallthru
      _
    // Predicated region
    $region18: #{advanced_dropout_forward.1} parent=1 // pred_check
      _
    $region19: #{advanced_dropout_forward.1} parent=1 // pred_check_branch
      %29 = sbr.rel (0) target = $region21
    $region20: #{advanced_dropout_forward.1} parent=1 // pred_region
      _
    $region21: #{advanced_dropout_forward.1} parent=1 // pred_fallthru
      _
    // Predicated region
    $region22: #{advanced_dropout_forward.1} parent=1 // pred_check
      _
    $region23: #{advanced_dropout_forward.1} parent=1 // pred_check_branch
      %31 = sbr.rel (0) target = $region25
    $region24: #{advanced_dropout_forward.1} parent=1 // pred_region
      %32 = dma.done [#allocation4], 16
    $region25: #{advanced_dropout_forward.1} parent=1 // pred_fallthru
      _
    %33 = sfence
    %s34 = sld [smem:[#allocation2]]
    %s35 = sld [smem:[#allocation2 + $0x1]]
    %s36 = sld [smem:[#allocation2 + $0x2]]
    %v37 = vld [vmem:[%s1] sm:$0xff]
    %v38 = vld [vmem:[%s3] sm:$0x1]
    %v40 = vlaneseq
    %v41 = vshrl.u32 %v40, 7
    %v42 = vsub.s32 0, %v41
    %v43 = vrot.slane %v38, %v42
    %v45 = vmul.f32 %v37, %v43
    %vm46 = vcmask 523264
    %v47 = vsel %vm46, %v45, 0.0
    %48 = vadd.xlane.f32.xlu0 %v47
    %v49 = vpop.xlane.xlu0 %48
    %v50 = vld [vmem:[%s4] sm:$0x1]
    %v52 = vlaneseq
    %v53 = vshrl.u32 %v52, 7
    %v54 = vsub.s32 0, %v53
    %v55 = vrot.slane %v50, %v54
    %v57 = vmul.f32 %v37, %v55
    %v58 = vsel %vm46, %v57, 0.0
    %59 = vadd.xlane.f32.xlu0 %v58
    %v60 = vpop.xlane.xlu0 %59
    %v61 = vrot.slane %v49, 4
    %v62 = vadd.f32 %v49, %v61
    %v63 = vrot.slane %v62, 2
    %v64 = vadd.f32 %v62, %v63
    %v65 = vrot.slane %v64, 1
    %v66 = vadd.f32 %v64, %v65
    %v67 = vstv %s36
    %v68 = vmul.f32 %v66, %v67
    %v69 = vstv %s34
    %v70 = vadd.f32 %v68, %v69
    %v71 = vstv %s35
    %v72 = vadd.f32 %v60, %v71
    %v73 = vmax.f32 %v72, 0.0
    %v74 = vand.u32 2147483647, %v72
    %v75 = vsub.f32 0.0, %v74
    %v76 = vmul.f32 %v75, 1.442695
    %v77 = vpow.pop %v76
    %v78 = vadd.f32 %v77, 1.0
    %v79 = vlog2.pop %v78
    %v80 = vmul.f32 %v79, 0.6931472
    %v81 = vadd.f32 %v73, %v80
    %v82 = vrot.slane %v81, 4
    %v83 = vadd.f32 %v81, %v82
    %v84 = vrot.slane %v83, 2
    %v85 = vadd.f32 %v83, %v84
    %v86 = vrot.slane %v85, 1
    %v87 = vadd.f32 %v85, %v86
    %v88 = vmul.f32 %v87, %v67
    %v89 = vmul.f32 %v88, 0.3925
    %v90 = vmul.f32 %v89, %v88
    %v91 = vadd.f32 %v90, 1.0
    %v92 = vrsqrt.pop %v91
    %v93 = vmul.f32 %v91, %v92
    %vm94 = vcmp.eq.f32.partialorder %v91, inf
    %v95 = vsel %vm94, %v91, %v93
    %vm96 = vcmp.eq.f32.partialorder %v91, 0.0
    %v97 = vand.u32 %v91, 2147483648
    %v98 = vsel %vm96, %v97, %v95
    %v99 = vrcp.pop %v98
    %v100 = vmul.f32 %v70, %v99
    %v101 = vsub.f32 0.0, %v100
    %v102 = vmul.f32 %v101, 1.442695
    %v103 = vpow.pop %v102
    %v104 = vadd.f32 %v103, 1.0
    %v105 = vld [vmem:[%s2] sm:$0xf]
    %v106 = vunpack.c.l.bf16 %v105
    %v107 = vmul.f32 %v88, %v106
    %v108 = vadd.f32 %v70, %v107
    %v109 = vxor.u32 %v108, 2147483648
    %v110 = vmul.f32 %v109, 1.442695
    %v111 = vpow.pop %v110
    %v112 = vadd.f32 %v111, 1.0
    %v113 = vrcp.pop %v112
    %v114 = vmul.f32 1.0, %v113
    %v115 = vmul.f32 %v37, %v114
    %v116 = vmul.f32 %v115, %v104
    %117 = vst.msk [vmem:[#allocation5] sm:$0xff] %vm46, %v116
    // Predicated region
    $region26: #{advanced_dropout_forward.1} parent=1 // pred_check
      _
    $region27: #{advanced_dropout_forward.1} parent=1 // pred_check_branch
      %119 = sbr.rel (0) target = $region29
    $region28: #{advanced_dropout_forward.1} parent=1 // pred_region
      %s121 = ssub.s32 128, 128
      %122 = vsyncadd [#allocation3], %s121
      %s124 = sshll.u32 [#allocation5], 4
      %s125 = int_to_ptr.vmem [resolvable:$true] %s124
      %127 = dma.vmem_to_hbm [thread:$0]  %s125, 128, %s5, [#allocation3]
    $region29: #{advanced_dropout_forward.1} parent=1 // pred_fallthru
      _
    // Predicated region
    $region30: #{advanced_dropout_forward.1} parent=1 // pred_check
      _
    $region31: #{advanced_dropout_forward.1} parent=1 // pred_check_branch
      %129 = sbr.rel (0) target = $region33
    $region32: #{advanced_dropout_forward.1} parent=1 // pred_region
      %130 = dma.done [#allocation3], 128
    $region33: #{advanced_dropout_forward.1} parent=1 // pred_fallthru
      _
    %131 = vsyncpa [#allocation3], 1
    %132 = vsyncpa [#allocation4], 1

</llo_original>
